<compile_context>
chip_gen: v7x
topology: tpu7x:2x2x1
jax: 0.10.0
libtpu: 0.0.40
codegen_flags: <defaults>
</compile_context>

<pallas_src>
import math
import functools

import jax
import jax.numpy as jnp
from jax import lax
from jax.experimental import pallas as pl
from jax.experimental.pallas import tpu as pltpu


# ----------------------------------------------------------------------------
# Tiled matmul kernel with fused epilogues
# ----------------------------------------------------------------------------

def _pick_tile(dim, preferred, align):
    """Largest multiple of `align` <= preferred that divides dim, else full dim."""
    cand = (min(preferred, dim) // align) * align
    while cand >= align:
        if dim % cand == 0:
            return cand
        cand -= align
    return dim


def _mm_kernel(mode, *refs):
    # mode: "bias" | "gelu" | "ln"
    if mode == "ln":
        x_ref, w_ref, b_ref, res_ref, g_ref, be_ref, o_ref, acc_ref = refs
    else:
        x_ref, w_ref, b_ref, o_ref, acc_ref = refs

    k = pl.program_id(2)

    @pl.when(k == 0)
    def _():
        acc_ref[...] = jnp.zeros_like(acc_ref)

    acc_ref[...] += jnp.dot(
        x_ref[...].astype(jnp.bfloat16),
        w_ref[...].astype(jnp.bfloat16),
        preferred_element_type=jnp.float32,
    )

    @pl.when(k == pl.num_programs(2) - 1)
    def _():
        y = acc_ref[...] + b_ref[...].astype(jnp.float32)
        if mode == "gelu":
            y = jax.nn.gelu(y, approximate=False)  # torch.nn.GELU() default (erf)
        elif mode == "ln":
            # residual add + LayerNorm (eps=1e-5, like nn.LayerNorm default)
            y = y + res_ref[...].astype(jnp.float32)
            mu = jnp.mean(y, axis=-1, keepdims=True)
            var = jnp.mean((y - mu) ** 2, axis=-1, keepdims=True)
            y = (y - mu) * lax.rsqrt(var + 1e-5)
            y = y * g_ref[...].astype(jnp.float32) + be_ref[...].astype(jnp.float32)
        o_ref[...] = y.astype(o_ref.dtype)


def matmul_pallas(x, w, b, *, mode="bias", res=None, gamma=None, beta=None,
                  out_dtype=jnp.bfloat16, tm_pref=256, tn_pref=256, tk_pref=512):
    """y = epilogue(x @ w + b).  x:(M,K) w:(K,N) b:(1,N)."""
    M, K = x.shape
    N = w.shape[1]

    tm = _pick_tile(M, tm_pref, 8)
    tk = _pick_tile(K, tk_pref, 128)
    # LayerNorm needs the full feature row in one block.
    tn = N if mode == "ln" else _pick_tile(N, tn_pref, 128)

    grid = (M // tm, N // tn, K // tk)

    in_specs = [
        pl.BlockSpec((tm, tk), lambda i, j, k: (i, k)),
        pl.BlockSpec((tk, tn), lambda i, j, k: (k, j)),
        pl.BlockSpec((1, tn), lambda i, j, k: (0, j)),
    ]
    args = [x, w, b]
    if mode == "ln":
        in_specs += [
            pl.BlockSpec((tm, tn), lambda i, j, k: (i, j)),
            pl.BlockSpec((1, tn), lambda i, j, k: (0, j)),
            pl.BlockSpec((1, tn), lambda i, j, k: (0, j)),
        ]
        args += [res, gamma, beta]

    return pl.pallas_call(
        functools.partial(_mm_kernel, mode),
        out_shape=jax.ShapeDtypeStruct((M, N), out_dtype),
        grid=grid,
        in_specs=in_specs,
        out_specs=pl.BlockSpec((tm, tn), lambda i, j, k: (i, j)),
        scratch_shapes=[pltpu.VMEM((tm, tn), jnp.float32)],
        compiler_params=pltpu.CompilerParams(
            dimension_semantics=("parallel", "parallel", "arbitrary")),
    )(*args)


# ----------------------------------------------------------------------------
# Attention kernels (one batch element per grid step, all heads in-kernel)
# ----------------------------------------------------------------------------

def _attend_heads(n_heads, dh, scale, get_q, get_k, get_v, bias, out_dtype):
    outs = []
    for h in range(n_heads):
        q = (get_q(h).astype(jnp.float32) * scale).astype(jnp.bfloat16)  # (Sq, dh)
        kk = get_k(h).astype(jnp.bfloat16)                               # (Sk, dh)
        vv = get_v(h).astype(jnp.bfloat16)                               # (Sk, dh)
        # scores = q @ k^T, f32 accumulation on the MXU
        s = lax.dot_general(q, kk, (((1,), (1,)), ((), ())),
                            preferred_element_type=jnp.float32) + bias
        m = jnp.max(s, axis=-1, keepdims=True)
        p = jnp.exp(s - m)
        l = jnp.sum(p, axis=-1, keepdims=True)
        p = p * pl.reciprocal(l, approx=True)
        outs.append(jnp.dot(p.astype(jnp.bfloat16), vv,
                            preferred_element_type=jnp.float32))
    # single lane-dense (Sq, D) store
    return jnp.concatenate(outs, axis=-1).astype(out_dtype)


def _self_attn_kernel(n_heads, dh, D, scale, qkv_ref, bias_ref, o_ref):
    qkv = qkv_ref[0]          # (Sq, 3D) bf16: [q heads | k heads | v heads]
    bias = bias_ref[...]      # (Sq, Sq) f32 additive mask
    gq = lambda h: qkv[:, h * dh:(h + 1) * dh]
    gk = lambda h: qkv[:, D + h * dh:D + (h + 1) * dh]
    gv = lambda h: qkv[:, 2 * D + h * dh:2 * D + (h + 1) * dh]
    o_ref[0] = _attend_heads(n_heads, dh, scale, gq, gk, gv, bias, o_ref.dtype)


def _cross_attn_kernel(n_heads, dh, D, scale, q_ref, kv_ref, bias_ref, o_ref):
    q = q_ref[0]              # (Sq, D)
    kv = kv_ref[0]            # (Sk, 2D): [k heads | v heads]
    bias = bias_ref[...]      # (Sq, Sk)
    gq = lambda h: q[:, h * dh:(h + 1) * dh]
    gk = lambda h: kv[:, h * dh:(h + 1) * dh]
    gv = lambda h: kv[:, D + h * dh:D + (h + 1) * dh]
    o_ref[0] = _attend_heads(n_heads, dh, scale, gq, gk, gv, bias, o_ref.dtype)


def self_attention_pallas(qkv, bias, n_heads, D):
    """qkv: (B, Sq, 3D) bf16, bias: (Sq, Sq) f32 -> (B, Sq, D) bf16."""
    B, Sq, _ = qkv.shape
    dh = D // n_heads
    scale = 1.0 / math.sqrt(dh)
    return pl.pallas_call(
        functools.partial(_self_attn_kernel, n_heads, dh, D, scale),
        out_shape=jax.ShapeDtypeStruct((B, Sq, D), qkv.dtype),
        grid=(B,),
        in_specs=[
            pl.BlockSpec((1, Sq, 3 * D), lambda b: (b, 0, 0)),
            pl.BlockSpec((Sq, Sq), lambda b: (0, 0)),
        ],
        out_specs=pl.BlockSpec((1, Sq, D), lambda b: (b, 0, 0)),
        compiler_params=pltpu.CompilerParams(dimension_semantics=("parallel",)),
    )(qkv, bias)


def cross_attention_pallas(q, kv, bias, n_heads, D):
    """q: (B, Sq, D), kv: (B, Sk, 2D) bf16, bias: (Sq, Sk) f32 -> (B, Sq, D)."""
    B, Sq, _ = q.shape
    Sk = kv.shape[1]
    dh = D // n_heads
    scale = 1.0 / math.sqrt(dh)
    return pl.pallas_call(
        functools.partial(_cross_attn_kernel, n_heads, dh, D, scale),
        out_shape=jax.ShapeDtypeStruct((B, Sq, D), q.dtype),
        grid=(B,),
        in_specs=[
            pl.BlockSpec((1, Sq, D), lambda b: (b, 0, 0)),
            pl.BlockSpec((1, Sk, 2 * D), lambda b: (b, 0, 0)),
            pl.BlockSpec((Sq, Sk), lambda b: (0, 0)),
        ],
        out_specs=pl.BlockSpec((1, Sq, D), lambda b: (b, 0, 0)),
        compiler_params=pltpu.CompilerParams(dimension_semantics=("parallel",)),
    )(q, kv, bias)


# ----------------------------------------------------------------------------
# Decoder glue (plain JAX orchestration of the Pallas kernels)
# ----------------------------------------------------------------------------

def _mask_to_bias(mask, shape):
    if mask is None:
        return jnp.zeros(shape, jnp.float32)
    return jnp.where(mask > 0, 0.0, -1e9).astype(jnp.float32)


def decoder_layer(p, x, enc, tgt_bias, src_bias, n_heads):
    """x: (B, S, D) bf16, enc: (B, Se, D) bf16."""
    B, S, D = x.shape
    Se = enc.shape[1]
    x2 = x.reshape(B * S, D)
    enc2 = enc.reshape(B * Se, D)

    # ---- self-attention: fused QKV matmul -> attention -> fused out-proj+res+LN1
    qkv = matmul_pallas(x2, p["sa_w_qkv"], p["sa_b_qkv"])               # (B*S, 3D)
    a = self_attention_pallas(qkv.reshape(B, S, 3 * D), tgt_bias, n_heads, D)
    # TODO(synk): dropout on attention output omitted (eval-mode identity).
    x2 = matmul_pallas(a.reshape(B * S, D), p["sa_w_o"], p["sa_b_o"],
                       mode="ln", res=x2, gamma=p["ln1_g"], beta=p["ln1_b"])

    # ---- cross-attention: q matmul + fused KV matmul -> attention -> out-proj+res+LN2
    q = matmul_pallas(x2, p["ca_w_q"], p["ca_b_q"])                     # (B*S, D)
    kv = matmul_pallas(enc2, p["ca_w_kv"], p["ca_b_kv"])                # (B*Se, 2D)
    c = cross_attention_pallas(q.reshape(B, S, D), kv.reshape(B, Se, 2 * D),
                               src_bias, n_heads, D)
    x2 = matmul_pallas(c.reshape(B * S, D), p["ca_w_o"], p["ca_b_o"],
                       mode="ln", res=x2, gamma=p["ln2_g"], beta=p["ln2_b"])

    # ---- feed-forward: matmul+bias+GELU -> matmul+bias+res+LN3
    h = matmul_pallas(x2, p["ff_w1"], p["ff_b1"], mode="gelu")          # (B*S, d_ff)
    x2 = matmul_pallas(h, p["ff_w2"], p["ff_b2"],
                       mode="ln", res=x2, gamma=p["ln3_g"], beta=p["ln3_b"])

    return x2.reshape(B, S, D)


def decoder(params, x, enc, tgt_mask, src_mask, n_heads):
    B, S, D = x.shape
    Se = enc.shape[1]
    tgt_bias = _mask_to_bias(tgt_mask, (S, S))
    src_bias = _mask_to_bias(src_mask, (S, Se))
    xb = x.astype(jnp.bfloat16)
    encb = enc.astype(jnp.bfloat16)
    for p in params:
        xb = decoder_layer(p, xb, encb, tgt_bias, src_bias, n_heads)
    return xb.astype(x.dtype)


# ----------------------------------------------------------------------------
# Deterministic parameter init (weights stored bf16, biases / LN params f32)
# ----------------------------------------------------------------------------

def _w(key, shape):
    return (0.02 * jax.random.normal(key, shape, jnp.float32)).astype(jnp.bfloat16)


def init_layer_params(key, d_model, d_ff):
    ks = jax.random.split(key, 7)
    D = d_model
    return dict(
        # self-attention (fused qkv)
        sa_w_qkv=_w(ks[0], (D, 3 * D)), sa_b_qkv=jnp.zeros((1, 3 * D), jnp.float32),
        sa_w_o=_w(ks[1], (D, D)),       sa_b_o=jnp.zeros((1, D), jnp.float32),
        # cross-attention (q separate, fused kv)
        ca_w_q=_w(ks[2], (D, D)),       ca_b_q=jnp.zeros((1, D), jnp.float32),
        ca_w_kv=_w(ks[3], (D, 2 * D)),  ca_b_kv=jnp.zeros((1, 2 * D), jnp.float32),
        ca_w_o=_w(ks[4], (D, D)),       ca_b_o=jnp.zeros((1, D), jnp.float32),
        # feed-forward
        ff_w1=_w(ks[5], (D, d_ff)),     ff_b1=jnp.zeros((1, d_ff), jnp.float32),
        ff_w2=_w(ks[6], (d_ff, D)),     ff_b2=jnp.zeros((1, D), jnp.float32),
        # layer norms
        ln1_g=jnp.ones((1, D), jnp.float32), ln1_b=jnp.zeros((1, D), jnp.float32),
        ln2_g=jnp.ones((1, D), jnp.float32), ln2_b=jnp.zeros((1, D), jnp.float32),
        ln3_g=jnp.ones((1, D), jnp.float32), ln3_b=jnp.zeros((1, D), jnp.float32),
    )


if __name__ == "__main__":
    # Small shapes consistent with the module.
    n_layers, d_model, n_heads, d_ff = 2, 32, 4, 64
    B, S_tgt, S_src = 2, 8, 8

    root = jax.random.PRNGKey(0)
    k_params, k_x, k_enc = jax.random.split(root, 3)
    layer_keys = jax.random.split(k_params, n_layers)
    params = [init_layer_params(k, d_model, d_ff) for k in layer_keys]

    x = jax.random.normal(k_x, (B, S_tgt, d_model), jnp.float32)
    enc = jax.random.normal(k_enc, (B, S_src, d_model), jnp.float32)

    # Causal target mask (1 = attend, 0 = masked); src mask = all ones.
    tgt_mask = jnp.tril(jnp.ones((S_tgt, S_tgt), jnp.float32))
    src_mask = jnp.ones((S_tgt, S_src), jnp.float32)

    out = decoder(params, x, enc, tgt_mask, src_mask, n_heads)
    out = jax.block_until_ready(out)
    assert out.shape == (B, S_tgt, d_model)
    assert jnp.all(jnp.isfinite(out))
    print("KERNEL_OK")
</pallas_src>

<mosaic_0001>
module attributes {stable_mosaic.version = 11 : i64} {
  func.func @_mm_kernel(%arg0: i32, %arg1: i32, %arg2: i32, %arg3: memref<16x32xbf16, #tpu.memory_space<vmem>>, %arg4: memref<32x96xbf16, #tpu.memory_space<vmem>>, %arg5: memref<1x96xf32, #tpu.memory_space<vmem>>, %arg6: memref<16x96xbf16, #tpu.memory_space<vmem>>, %arg7: memref<16x96xf32, #tpu.memory_space<vmem>>) attributes {dimension_semantics = [#tpu.dimension_semantics<parallel>, #tpu.dimension_semantics<parallel>, #tpu.dimension_semantics<arbitrary>], iteration_bounds = array<i64: 1, 1, 1>, scalar_prefetch = 0 : i64, scratch_operands = 1 : i64, tpu.core_type = #tpu.core_type<tc>, window_params = [{transform_indices = @transform_0, window_bounds = array<i64: 16, 32>}, {transform_indices = @transform_1, window_bounds = array<i64: 32, 96>}, {transform_indices = @transform_2, window_bounds = array<i64: 1, 96>}, {transform_indices = @transform_3, window_bounds = array<i64: 16, 96>}]} {
    %c0_i32 = arith.constant 0 : i32
    %0 = arith.cmpi eq, %arg2, %c0_i32 : i32
    %1 = arith.extui %0 : i1 to i32
    %c0_i32_0 = arith.constant 0 : i32
    %2 = arith.cmpi ne, %1, %c0_i32_0 : i32
    scf.if %2 {
      %cst_10 = arith.constant 0.000000e+00 : f32
      %12 = vector.broadcast %cst_10 : f32 to vector<16x96xf32>
      %c0_11 = arith.constant 0 : index
      %c0_12 = arith.constant 0 : index
      %13 = vector.load %arg7[%c0_11, %c0_12] : memref<16x96xf32, #tpu.memory_space<vmem>>, vector<16x96xf32>
      tpu.vector_store %arg7[%c0_11, %c0_12], %12 {strides = array<i32>} : memref<16x96xf32, #tpu.memory_space<vmem>>, vector<16x96xf32>,
    } else {
    }
    %c0 = arith.constant 0 : index
    %c0_1 = arith.constant 0 : index
    %3 = vector.load %arg7[%c0, %c0_1] : memref<16x96xf32, #tpu.memory_space<vmem>>, vector<16x96xf32>
    %c0_2 = arith.constant 0 : index
    %c0_3 = arith.constant 0 : index
    %4 = vector.load %arg3[%c0_2, %c0_3] : memref<16x32xbf16, #tpu.memory_space<vmem>>, vector<16x32xbf16>
    %c0_4 = arith.constant 0 : index
    %c0_5 = arith.constant 0 : index
    %5 = vector.load %arg4[%c0_4, %c0_5] : memref<32x96xbf16, #tpu.memory_space<vmem>>, vector<32x96xbf16>
    %cst = arith.constant dense<0.000000e+00> : vector<16x96xf32>
    %6 = tpu.matmul %4, %5, %cst {dimension_numbers = #tpu.dot_dimension_numbers<[1], [0], [0], [1], [0, 0, 1, 1], [], []>} : vector<16x32xbf16>, vector<32x96xbf16>, vector<16x96xf32> -> vector<16x96xf32>
    %7 = arith.addf %3, %6 : vector<16x96xf32>
    %c0_6 = arith.constant 0 : index
    %c0_7 = arith.constant 0 : index
    %8 = vector.load %arg7[%c0_6, %c0_7] : memref<16x96xf32, #tpu.memory_space<vmem>>, vector<16x96xf32>
    tpu.vector_store %arg7[%c0_6, %c0_7], %7 {strides = array<i32>} : memref<16x96xf32, #tpu.memory_space<vmem>>, vector<16x96xf32>,
    %c0_i32_8 = arith.constant 0 : i32
    %9 = arith.cmpi eq, %arg2, %c0_i32_8 : i32
    %10 = arith.extui %9 : i1 to i32
    %c0_i32_9 = arith.constant 0 : i32
    %11 = arith.cmpi ne, %10, %c0_i32_9 : i32
    scf.if %11 {
      %c0_10 = arith.constant 0 : index
      %c0_11 = arith.constant 0 : index
      %12 = vector.load %arg7[%c0_10, %c0_11] : memref<16x96xf32, #tpu.memory_space<vmem>>, vector<16x96xf32>
      %c0_12 = arith.constant 0 : index
      %c0_13 = arith.constant 0 : index
      %13 = vector.load %arg5[%c0_12, %c0_13] : memref<1x96xf32, #tpu.memory_space<vmem>>, vector<1x96xf32>
      %14 = vector.broadcast %13 : vector<1x96xf32> to vector<16x96xf32>
      %15 = arith.addf %12, %14 : vector<16x96xf32>
      %16 = arith.truncf %15 : vector<16x96xf32> to vector<16x96xbf16>
      %c0_14 = arith.constant 0 : index
      %c0_15 = arith.constant 0 : index
      %17 = vector.load %arg6[%c0_14, %c0_15] : memref<16x96xbf16, #tpu.memory_space<vmem>>, vector<16x96xbf16>
      tpu.vector_store %arg6[%c0_14, %c0_15], %16 {strides = array<i32>} : memref<16x96xbf16, #tpu.memory_space<vmem>>, vector<16x96xbf16>,
    } else {
    }
    return
  }
  func.func @transform_0(%arg0: i32, %arg1: i32, %arg2: i32) -> (i32, i32) {
    %c0_i32 = arith.constant 0 : i32
    return %arg0, %arg2 : i32, i32
  }
  func.func @transform_1(%arg0: i32, %arg1: i32, %arg2: i32) -> (i32, i32) {
    %c0_i32 = arith.constant 0 : i32
    return %arg2, %arg1 : i32, i32
  }
  func.func @transform_2(%arg0: i32, %arg1: i32, %arg2: i32) -> (i32, i32) {
    %c0_i32 = arith.constant 0 : i32
    %c0_i32_0 = arith.constant 0 : i32
    return %c0_i32, %arg1 : i32, i32
  }
  func.func @transform_3(%arg0: i32, %arg1: i32, %arg2: i32) -> (i32, i32) {
    %c0_i32 = arith.constant 0 : i32
    return %arg0, %arg1 : i32, i32
  }
}

</mosaic_0001>

<llo_original>
// kernel: tpu_custom_call.1
$region0: #{tpu_custom_call.1}
  #allocation0 [shape = 'u32[]', space=smem, size = 0x4, offset = 0x4, fixed_abs, tag = 'smem constant byte address 0x4 - core index']
  #allocation1 [shape = 'u32[144,128]{1,0:T(1,128)}', space=vmem, size = 0x12000, scoped, tag = 'internal scratch']
  #allocation2 [shape = 'f32[16,96]{1,0:T(8,128)}', space=vmem, size = 0x2000, scoped, tag = 'scratch operand']
  %s0 = inlined_call_operand.hbm [shape: bf16[16,32], index: 0, kind: input, shape index: {}]
  %s1 = inlined_call_operand.hbm [shape: bf16[32,96], index: 1, kind: input, shape index: {}]
  %s2 = inlined_call_operand.vmem [shape: f32[1,96], index: 2, kind: input, shape index: {}]
  %s3 = inlined_call_operand.hbm [shape: bf16[16,96], index: 3, kind: output, shape index: {}]
  %s4 = sld [smem:[#allocation0]]
  $region38: #{tpu_custom_call.1} parent=0
    _
  %s6 = ssub.s32 1, %s4
  %s7 = scalar_select 0, %s6, %s4
  $region1: #{tpu_custom_call.1} parent=0
    #allocation3 [shape = 'u8[4096]{0}', space=vmem, size = 0x1000, scoped, tag = 'input window, operand 0, single buffered']
    #allocation4 [shape = 's32[1]{0}', space=sflag, size = 0x4, scoped, tag = 'scoped memory for tpu_custom_call.1']
    #allocation5 [shape = 's32[1]{0}', space=sflag, size = 0x4, scoped, tag = 'scoped memory for tpu_custom_call.1']
    #allocation6 [shape = 'u8[8192]{0}', space=vmem, size = 0x2000, scoped, tag = 'input window, operand 1, single buffered']
    #allocation7 [shape = 's32[1]{0}', space=sflag, size = 0x4, scoped, tag = 'scoped memory for tpu_custom_call.1']
    #allocation8 [shape = 'u8[4096]{0}', space=vmem, size = 0x1000, scoped, tag = 'output window, operand 0, single buffered']
    %8 = vsyncpa [#allocation4], 0
    %9 = vsyncpa [#allocation7], 0
    %10 = vsyncpa [#allocation5], 0
    // Predicated region
    $region2: #{tpu_custom_call.1} parent=1 // pred_check
      _
    $region3: #{tpu_custom_call.1} parent=1 // pred_check_branch
      %12 = sbr.rel (0) target = $region5
    $region4: #{tpu_custom_call.1} parent=1 // pred_region
      %s14 = ssub.s32 128, 128
      %15 = vsyncadd [#allocation4], %s14
      %s16 = sshll.u32 [#allocation3], 4
      %s17 = int_to_ptr.vmem [resolvable:$true] %s16
      %22 = dma.hbm_to_vmem [thread:$0]  %s0, 128, %s17, [#allocation4], 64, 64, 4
    $region5: #{tpu_custom_call.1} parent=1 // pred_fallthru
      _
    // Predicated region
    $region6: #{tpu_custom_call.1} parent=1 // pred_check
      _
    $region7: #{tpu_custom_call.1} parent=1 // pred_check_branch
      %24 = sbr.rel (0) target = $region9
    $region8: #{tpu_custom_call.1} parent=1 // pred_region
      %s26 = ssub.s32 256, 256
      %27 = vsyncadd [#allocation7], %s26
      %s28 = sshll.u32 [#allocation6], 4
      %s29 = int_to_ptr.vmem [resolvable:$true] %s28
      %34 = dma.hbm_to_vmem [thread:$0]  %s1, 256, %s29, [#allocation7], 64, 64, 4
    $region9: #{tpu_custom_call.1} parent=1 // pred_fallthru
      _
    // Predicated region
    $region10: #{tpu_custom_call.1} parent=1 // pred_check
      _
    $region11: #{tpu_custom_call.1} parent=1 // pred_check_branch
      %36 = sbr.rel (0) target = $region13
    $region12: #{tpu_custom_call.1} parent=1 // pred_region
      _
    $region13: #{tpu_custom_call.1} parent=1 // pred_fallthru
      _
    // Predicated region
    $region14: #{tpu_custom_call.1} parent=1 // pred_check
      _
    $region15: #{tpu_custom_call.1} parent=1 // pred_check_branch
      %38 = sbr.rel (0) target = $region17
    $region16: #{tpu_custom_call.1} parent=1 // pred_region
      %39 = dma.done [#allocation4], 128
    $region17: #{tpu_custom_call.1} parent=1 // pred_fallthru
      _
    // Predicated region
    $region18: #{tpu_custom_call.1} parent=1 // pred_check
      _
    $region19: #{tpu_custom_call.1} parent=1 // pred_check_branch
      %41 = sbr.rel (0) target = $region21
    $region20: #{tpu_custom_call.1} parent=1 // pred_region
      %42 = dma.done [#allocation7], 256
    $region21: #{tpu_custom_call.1} parent=1 // pred_fallthru
      _
    %p44 = scmp.eq.s32.totalorder 0, 0
    // Predicated region
    $region22: #{tpu_custom_call.1} parent=1 // pred_check
      %p45 = pneg %p44
    $region23: #{tpu_custom_call.1} parent=1 // pred_check_branch
      %47 = sbr.rel (%p45) target = $region25
    $region24: #{tpu_custom_call.1} parent=1 // pred_region
      %vm48 = vcmask 785408
      %49 = vst.msk [vmem:[#allocation2] sm:$0xff] %vm48, 0.0
      %50 = vst.msk [vmem:[#allocation2 + $0x8] sm:$0xff] %vm48, 0.0
    $region25: #{tpu_custom_call.1} parent=1 // pred_fallthru
      _
    %v51 = vld [vmem:[#allocation2] sm:$0xff]
    %v52 = vld [vmem:[#allocation2 + $0x8] sm:$0xff]
    %v53 = vld [vmem:[#allocation3] sm:$0xf]
    %v54 = vld [vmem:[#allocation3 + $0x4] sm:$0xf]
    %v55 = vld [vmem:[#allocation6] sm:$0xf]
    %v56 = vld [vmem:[#allocation6 + $0x4] sm:$0xf]
    %v57 = vld [vmem:[#allocation6 + $0x8] sm:$0xf]
    %v58 = vld [vmem:[#allocation6 + $0xc] sm:$0xf]
    %v61 = vunpack.c.l.b16 %v53
    %v62 = vunpack.c.l.b16 %v54
    %v63 = vpack.c.b16 %v62, %v61
    %v68 = vunpack.c.l.b16 %v55
    %v69 = vunpack.c.l.b16 %v56
    %v70 = vunpack.c.l.b16 %v57
    %v71 = vunpack.c.l.b16 %v58
    %v72 = vpack.c.b16 %v69, %v68
    %v73 = vpack.c.b16 %v71, %v70
    %vm76 = vcmask 261120
    %v78 = vsel %vm76, %v63, 0
    %80 = vmatprep.subr.bf16.mxu0 0
    %81 = vmatpush1.bf16.msra.mxu0 %v72
    %82 = vmatprep.subr.bf16.mxu0 0
    %83 = vmatpush1.bf16.msra.mxu0 %v73
    %84 = vmatprep.subr.bf16.mxu0 0
    %85 = vmatpush1.bf16.msra.mxu0 0
    %86 = vmatprep.subr.bf16.mxu0 0
    %87 = vmatpush1.bf16.msra.mxu0 0
    %88 = vmatprep.subr.bf16.mxu0 0
    %89 = vmatpush1.bf16.msra.mxu0 0
    %90 = vmatprep.subr.bf16.mxu0 0
    %91 = vmatpush1.bf16.msra.mxu0 0
    %92 = vmatprep.subr.bf16.mxu0 0
    %93 = vmatpush1.bf16.msra.mxu0 0
    %94 = vmatprep.subr.bf16.mxu0 0
    %95 = vmatpush1.bf16.msra.mxu0 0
    %96 = vmatprep.subr.bf16.mxu0 0
    %97 = vmatpush1.bf16.msra.mxu0 0
    %98 = vmatprep.subr.bf16.mxu0 0
    %99 = vmatpush1.bf16.msra.mxu0 0
    %100 = vmatprep.subr.bf16.mxu0 0
    %101 = vmatpush1.bf16.msra.mxu0 0
    %102 = vmatprep.subr.bf16.mxu0 0
    %103 = vmatpush1.bf16.msra.mxu0 0
    %104 = vmatprep.subr.bf16.mxu0 0
    %105 = vmatpush1.bf16.msra.mxu0 0
    %106 = vmatprep.subr.bf16.mxu0 0
    %107 = vmatpush1.bf16.msra.mxu0 0
    %108 = vmatprep.subr.bf16.mxu0 0
    %109 = vmatpush1.bf16.msra.mxu0 0
    %110 = vmatprep.subr.bf16.mxu0 0
    %111 = vmatpush1.bf16.msra.mxu0 0
    %112 = vmatprep.mubr.bf16.mxu0 0
    %113 = vmatmul.mubr.bf16.gmra.mrb[0].mxu0 %v78
    %v114 = vpop.f32.mrb[0].mxu0
    %v115 = vadd.f32 0.0, %v114
    %v116 = vpop.f32.mrb[0].mxu0
    %v117 = vpop.f32.mrb[0].mxu0
    %v118 = vadd.f32 0.0, %v117
    %v119 = vpop.f32.mrb[0].mxu0
    %120 = vdwg.mxu0
    %v121 = vadd.f32 %v51, %v115
    %v122 = vadd.f32 %v52, %v118
    %vm123 = vcmask 785408
    %124 = vst.msk [vmem:[#allocation2] sm:$0xff] %vm123, %v121
    %125 = vst.msk [vmem:[#allocation2 + $0x8] sm:$0xff] %vm123, %v122
    // Predicated region
    $region26: #{tpu_custom_call.1} parent=1 // pred_check
      %p126 = pneg %p44
    $region27: #{tpu_custom_call.1} parent=1 // pred_check_branch
      %128 = sbr.rel (%p126) target = $region29
    $region28: #{tpu_custom_call.1} parent=1 // pred_region
      %v129 = vld [vmem:[#allocation2] sm:$0xff]
      %v130 = vld [vmem:[#allocation2 + $0x8] sm:$0xff]
      %v131 = vld [vmem:[%s2] sm:$0x1]
      %v133 = vlaneseq
      %v134 = vshrl.u32 %v133, 7
      %v135 = vsub.s32 0, %v134
      %v136 = vrot.slane %v131, %v135
      %v138 = vadd.f32 %v129, %v136
      %v139 = vadd.f32 %v130, %v136
      %v140 = vpack.c.bf16 %v139, %v138
      %v142 = vunpack.c.l.b16 %v140
      %v143 = vunpack.c.h.b16 %v140
      %v144 = vpack.c.b16 %v142, %v142
      %v145 = vpack.c.b16 %v143, %v143
      %vm148 = vcmask 781312
      %149 = vst.msk [vmem:[#allocation8] sm:$0xf] %vm148, %v144
      %150 = vst.msk [vmem:[#allocation8 + $0x4] sm:$0xf] %vm148, %v145
    $region29: #{tpu_custom_call.1} parent=1 // pred_fallthru
      _
    // Predicated region
    $region30: #{tpu_custom_call.1} parent=1 // pred_check
      _
    $region31: #{tpu_custom_call.1} parent=1 // pred_check_branch
      %152 = sbr.rel (0) target = $region33
    $region32: #{tpu_custom_call.1} parent=1 // pred_region
      %s154 = ssub.s32 128, 128
      %155 = vsyncadd [#allocation5], %s154
      %s156 = sshll.u32 [#allocation8], 4
      %s157 = int_to_ptr.vmem [resolvable:$true] %s156
      %162 = dma.vmem_to_hbm [thread:$0]  %s157, 128, %s3, [#allocation5], 64, 64, 4
    $region33: #{tpu_custom_call.1} parent=1 // pred_fallthru
      _
    // Predicated region
    $region34: #{tpu_custom_call.1} parent=1 // pred_check
      _
    $region35: #{tpu_custom_call.1} parent=1 // pred_check_branch
      %164 = sbr.rel (0) target = $region37
    $region36: #{tpu_custom_call.1} parent=1 // pred_region
      %165 = dma.done [#allocation5], 128
    $region37: #{tpu_custom_call.1} parent=1 // pred_fallthru
      _
    %166 = vsyncpa [#allocation4], 1
    %167 = vsyncpa [#allocation7], 1
    %168 = vsyncpa [#allocation5], 1

</llo_original>
